<compile_context>
chip_gen: v6e
topology: v6e:2x2x1
jax: 0.10.0
libtpu: 0.0.40
codegen_flags: <defaults>
</compile_context>

<pallas_src>
import jax
import jax.numpy as jnp
from jax import lax
from jax.experimental import pallas as pl
from jax.experimental.pallas import tpu as pltpu

LANES = 128
MAX_ROW_TILE = 1024  # 1024 x 128 x 4 B = 512 KiB per input block (fits v7x VMEM easily)


def _logl1_partial_kernel(n_ref, fs_ref, ft_ref, out_ref):
    """Per-block partial sum of log(|fs - ft| + 0.5), tail-masked by n_ref[0]."""
    i = pl.program_id(0)
    rt, lanes = fs_ref.shape  # static block shape (row_tile, 128)

    fs = fs_ref[...].astype(jnp.float32)
    ft = ft_ref[...].astype(jnp.float32)
    diff = jnp.abs(fs - ft)

    # Global flat element index of every position in this block (row-major).
    row_idx = lax.broadcasted_iota(jnp.int32, (rt, lanes), 0)
    lane_idx = lax.broadcasted_iota(jnp.int32, (rt, lanes), 1)
    flat_idx = (i * rt + row_idx) * lanes + lane_idx
    valid = flat_idx < n_ref[0]

    # Masked positions -> |diff| = 0.5 -> log(0.5 + 0.5) = 0 contribution.
    vals = jnp.log(jnp.where(valid, diff, jnp.float32(0.5)) + jnp.float32(0.5))

    # Reduce the whole block to one lane-dense (1, 128) partial sum
    # (inter-vreg adds are VPU; only one sublane reduce per block).
    out_ref[...] = jnp.sum(vals, axis=0, keepdims=True)


def logl1_loss_v2(f_s, f_t):
    """mean(log(|f_s - f_t| + 0.5)) computed with a Pallas TPU kernel."""
    assert f_s.shape == f_t.shape, "inputs must have identical shapes"
    total_n = int(f_s.size)

    flat_s = f_s.reshape(-1)
    flat_t = f_t.reshape(-1)

    # Only pad up to the next multiple of 128 lanes (<= 127 elements); the pad
    # values are irrelevant because the kernel masks by the true element count.
    # TODO(synk): for non-128-divisible sizes this small pad still costs one
    # HBM copy of the flattened inputs; acceptable for typical feature maps.
    pad = (-total_n) % LANES
    if pad:
        flat_s = jnp.pad(flat_s, (0, pad))
        flat_t = jnp.pad(flat_t, (0, pad))

    rows = flat_s.size // LANES
    if rows < 8:
        row_tile = rows                      # full-dim block (allowed when < 8)
    else:
        row_tile = min(MAX_ROW_TILE, (rows // 8) * 8)  # sublane-aligned big tile
    grid = pl.cdiv(rows, row_tile)           # last block may be ragged -> masked

    fs2 = flat_s.reshape(rows, LANES)
    ft2 = flat_t.reshape(rows, LANES)
    n_arr = jnp.array([total_n], dtype=jnp.int32)

    cost = pl.CostEstimate(
        flops=4 * total_n,
        transcendentals=total_n,
        bytes_accessed=fs2.size * fs2.dtype.itemsize
        + ft2.size * ft2.dtype.itemsize
        + grid * LANES * 4,
    )

    partials = pl.pallas_call(
        _logl1_partial_kernel,
        out_shape=jax.ShapeDtypeStruct((grid, LANES), jnp.float32),
        grid_spec=pltpu.PrefetchScalarGridSpec(
            num_scalar_prefetch=1,
            grid=(grid,),
            in_specs=[
                pl.BlockSpec((row_tile, LANES), lambda i, n: (i, 0)),
                pl.BlockSpec((row_tile, LANES), lambda i, n: (i, 0)),
            ],
            out_specs=pl.BlockSpec((1, LANES), lambda i, n: (i, 0)),
        ),
        compiler_params=pltpu.CompilerParams(
            dimension_semantics=("parallel",),
        ),
        cost_estimate=cost,
    )(n_arr, fs2, ft2)

    # Tiny final reduction + exact mean in the wrapper.
    return jnp.sum(partials, dtype=jnp.float32) / jnp.float32(total_n)


if __name__ == "__main__":
    key = jax.random.PRNGKey(0)
    k1, k2 = jax.random.split(key)
    # NCHW-shaped student vs teacher predictions, small shapes.
    f_s = jax.random.normal(k1, (2, 4, 16, 16), dtype=jnp.float32)
    f_t = jax.random.normal(k2, (2, 4, 16, 16), dtype=jnp.float32)

    loss = logl1_loss_v2(f_s, f_t)
    jax.block_until_ready(loss)

    # Reference check in plain JAX.
    ref = jnp.mean(jnp.log(jnp.abs(f_s - f_t) + 0.5))
    assert jnp.allclose(loss, ref, atol=1e-5, rtol=1e-5), (loss, ref)

    print("KERNEL_OK")
</pallas_src>

<mosaic_0001>
module attributes {stable_mosaic.version = 11 : i64} {
  func.func @_logl1_partial_kernel(%arg0: i32, %arg1: memref<1xi32, #tpu.memory_space<smem>>, %arg2: memref<16x128xf32, #tpu.memory_space<vmem>>, %arg3: memref<16x128xf32, #tpu.memory_space<vmem>>, %arg4: memref<1x128xf32, #tpu.memory_space<vmem>>) attributes {dimension_semantics = [#tpu.dimension_semantics<parallel>], iteration_bounds = array<i64: 1>, scalar_prefetch = 1 : i64, scratch_operands = 0 : i64, tpu.core_type = #tpu.core_type<tc>, window_params = [{transform_indices = @transform_0, window_bounds = array<i64: 16, 128>}, {transform_indices = @transform_1, window_bounds = array<i64: 16, 128>}, {transform_indices = @transform_2, window_bounds = array<i64: 1, 128>}]} {
    %c0 = arith.constant 0 : index
    %c0_0 = arith.constant 0 : index
    %0 = vector.load %arg2[%c0, %c0_0] : memref<16x128xf32, #tpu.memory_space<vmem>>, vector<16x128xf32>
    %c0_1 = arith.constant 0 : index
    %c0_2 = arith.constant 0 : index
    %1 = vector.load %arg3[%c0_1, %c0_2] : memref<16x128xf32, #tpu.memory_space<vmem>>, vector<16x128xf32>
    %2 = arith.subf %0, %1 : vector<16x128xf32>
    %3 = math.absf %2 : vector<16x128xf32>
    %4 = tpu.iota {dimensions = array<i32: 0>} : vector<16x128xi32>
    %5 = tpu.iota {dimensions = array<i32: 1>} : vector<16x128xi32>
    %c16_i32 = arith.constant 16 : i32
    %6 = arith.muli %arg0, %c16_i32 : i32
    %7 = vector.broadcast %6 : i32 to vector<16x128xi32>
    %8 = arith.addi %7, %4 : vector<16x128xi32>
    %c128_i32 = arith.constant 128 : i32
    %9 = vector.broadcast %c128_i32 : i32 to vector<16x128xi32>
    %10 = arith.muli %8, %9 : vector<16x128xi32>
    %11 = arith.addi %10, %5 : vector<16x128xi32>
    %c0_3 = arith.constant 0 : index
    %12 = memref.load %arg1[%c0_3] : memref<1xi32, #tpu.memory_space<smem>>
    %13 = vector.broadcast %12 : i32 to vector<16x128xi32>
    %14 = arith.cmpi slt, %11, %13 : vector<16x128xi32>
    %cst = arith.constant 5.000000e-01 : f32
    %15 = vector.broadcast %cst : f32 to vector<16x128xf32>
    %16 = arith.select %14, %3, %15 : vector<16x128xi1>, vector<16x128xf32>
    %cst_4 = arith.constant 5.000000e-01 : f32
    %17 = vector.broadcast %cst_4 : f32 to vector<16x128xf32>
    %18 = arith.addf %16, %17 : vector<16x128xf32>
    %19 = math.log %18 : vector<16x128xf32>
    %cst_5 = arith.constant dense<0.000000e+00> : vector<128xf32>
    %20 = vector.multi_reduction <add>, %19, %cst_5 [0] : vector<16x128xf32> to vector<128xf32>
    %21 = vector.shape_cast %20 : vector<128xf32> to vector<1x128xf32>
    %c0_6 = arith.constant 0 : index
    %c0_7 = arith.constant 0 : index
    %22 = vector.load %arg4[%c0_6, %c0_7] : memref<1x128xf32, #tpu.memory_space<vmem>>, vector<1x128xf32>
    tpu.vector_store %arg4[%c0_6, %c0_7], %21 {strides = array<i32>} : memref<1x128xf32, #tpu.memory_space<vmem>>, vector<1x128xf32>,
    return
  }
  func.func @transform_0(%arg0: i32, %arg1: memref<1xi32, #tpu.memory_space<smem>>) -> (i32, i32) {
    %c0_i32 = arith.constant 0 : i32
    %c0_i32_0 = arith.constant 0 : i32
    return %arg0, %c0_i32 : i32, i32
  }
  func.func @transform_1(%arg0: i32, %arg1: memref<1xi32, #tpu.memory_space<smem>>) -> (i32, i32) {
    %c0_i32 = arith.constant 0 : i32
    %c0_i32_0 = arith.constant 0 : i32
    return %arg0, %c0_i32 : i32, i32
  }
  func.func @transform_2(%arg0: i32, %arg1: memref<1xi32, #tpu.memory_space<smem>>) -> (i32, i32) {
    %c0_i32 = arith.constant 0 : i32
    %c0_i32_0 = arith.constant 0 : i32
    return %arg0, %c0_i32 : i32, i32
  }
}

</mosaic_0001>

<llo_original>
// kernel: tpu_custom_call.1
$region0: #{tpu_custom_call.1}
  #allocation0 [shape = 'u32[]', space=smem, size = 0x4, offset = 0x4, fixed_abs, tag = 'smem constant byte address 0x4 - core index']
  #allocation1 [shape = 'u32[144,128]{1,0:T(1,128)}', space=vmem, size = 0x12000, scoped, tag = 'internal scratch']
  #allocation2 [shape = 's32[1]{0}', space=sflag, size = 0x4, scoped, tag = 'scoped memory for tpu_custom_call.1']
  #allocation3 [shape = 's32[1]{0:T(128)S(6)}', space=smem, size = 0x200, scoped, tag = 'prefetched SMEM operand 0']
  %s0 = inlined_call_operand.<no memory space> [shape: s32[1], index: 0, kind: input, shape index: {}]
  %s1 = inlined_call_operand.hbm [shape: f32[16,128], index: 1, kind: input, shape index: {}]
  %s2 = inlined_call_operand.hbm [shape: f32[16,128], index: 2, kind: input, shape index: {}]
  %s3 = inlined_call_operand.hbm [shape: f32[1,128], index: 3, kind: output, shape index: {}]
  %s4 = sld [smem:[#allocation0]]
  $region26: #{tpu_custom_call.1} parent=0
    _
  %s6 = ssub.s32 1, %s4
  %s7 = scalar_select 0, %s6, %s4
  %8 = sst [smem:[#allocation3]] %s0
  $region1: #{tpu_custom_call.1} parent=0
    #allocation4 [shape = 'u8[8192]{0}', space=vmem, size = 0x2000, scoped, tag = 'input window, operand 1, single buffered']
    #allocation5 [shape = 's32[1]{0}', space=sflag, size = 0x4, scoped, tag = 'scoped memory for tpu_custom_call.1']
    #allocation6 [shape = 's32[1]{0}', space=sflag, size = 0x4, scoped, tag = 'scoped memory for tpu_custom_call.1']
    #allocation7 [shape = 'u8[8192]{0}', space=vmem, size = 0x2000, scoped, tag = 'input window, operand 2, single buffered']
    #allocation8 [shape = 's32[1]{0}', space=sflag, size = 0x4, scoped, tag = 'scoped memory for tpu_custom_call.1']
    #allocation9 [shape = 'u8[512]{0}', space=vmem, size = 0x400, scoped, tag = 'output window, operand 0, single buffered']
    %9 = vsyncpa [#allocation5], 0
    %10 = vsyncpa [#allocation8], 0
    %11 = vsyncpa [#allocation6], 0
    // Predicated region
    $region2: #{tpu_custom_call.1} parent=1 // pred_check
      _
    $region3: #{tpu_custom_call.1} parent=1 // pred_check_branch
      %13 = sbr.rel (0) target = $region5
    $region4: #{tpu_custom_call.1} parent=1 // pred_region
      %s15 = ssub.s32 256, 256
      %16 = vsyncadd [#allocation5], %s15
      %s17 = sshll.u32 [#allocation4], 4
      %s18 = int_to_ptr.vmem [resolvable:$true] %s17
      %23 = dma.hbm_to_vmem [thread:$0]  %s1, 256, %s18, [#allocation5], 128, 128, 8
    $region5: #{tpu_custom_call.1} parent=1 // pred_fallthru
      _
    // Predicated region
    $region6: #{tpu_custom_call.1} parent=1 // pred_check
      _
    $region7: #{tpu_custom_call.1} parent=1 // pred_check_branch
      %25 = sbr.rel (0) target = $region9
    $region8: #{tpu_custom_call.1} parent=1 // pred_region
      %s27 = ssub.s32 256, 256
      %28 = vsyncadd [#allocation8], %s27
      %s29 = sshll.u32 [#allocation7], 4
      %s30 = int_to_ptr.vmem [resolvable:$true] %s29
      %35 = dma.hbm_to_vmem [thread:$0]  %s2, 256, %s30, [#allocation8], 128, 128, 8
    $region9: #{tpu_custom_call.1} parent=1 // pred_fallthru
      _
    // Predicated region
    $region10: #{tpu_custom_call.1} parent=1 // pred_check
      _
    $region11: #{tpu_custom_call.1} parent=1 // pred_check_branch
      %37 = sbr.rel (0) target = $region13
    $region12: #{tpu_custom_call.1} parent=1 // pred_region
      %38 = dma.done [#allocation5], 256
    $region13: #{tpu_custom_call.1} parent=1 // pred_fallthru
      _
    // Predicated region
    $region14: #{tpu_custom_call.1} parent=1 // pred_check
      _
    $region15: #{tpu_custom_call.1} parent=1 // pred_check_branch
      %40 = sbr.rel (0) target = $region17
    $region16: #{tpu_custom_call.1} parent=1 // pred_region
      %41 = dma.done [#allocation8], 256
    $region17: #{tpu_custom_call.1} parent=1 // pred_fallthru
      _
    %v42 = vld [vmem:[#allocation4] sm:$0xff]
    %v43 = vld [vmem:[#allocation4 + $0x8] sm:$0xff]
    %v44 = vld [vmem:[#allocation7] sm:$0xff]
    %v45 = vld [vmem:[#allocation7 + $0x8] sm:$0xff]
    %v46 = vsub.f32 %v42, %v44
    %v47 = vsub.f32 %v43, %v45
    %v48 = vand.u32 2147483647, %v46
    %v49 = vand.u32 2147483647, %v47
    %v50 = vlaneseq
    %v51 = vshrl.u32 %v50, 7
    %v52 = vadd.s32 %v51, 8
    %v53 = vlaneseq
    %v54 = vand.u32 %v53, 127
    %s55 = smul.u32 0, 16
    %v56 = vstv %s55
    %v57 = vadd.s32 %v56, %v51
    %v58 = vadd.s32 %v56, %v52
    %v59 = vmul.u32 %v57, 128
    %v60 = vmul.u32 %v58, 128
    %v61 = vadd.s32 %v59, %v54
    %v62 = vadd.s32 %v60, %v54
    %s63 = sld [smem:[#allocation3]]
    %v64 = vstv %s63
    %vm65 = vcmp.lt.s32.totalorder %v61, %v64
    %vm66 = vcmp.lt.s32.totalorder %v62, %v64
    %v67 = vsel %vm65, %v48, 0.5
    %v68 = vsel %vm66, %v49, 0.5
    %v69 = vadd.f32 %v67, 0.5
    %v70 = vadd.f32 %v68, 0.5
    %v71 = vlog2.pop %v69
    %v72 = vmul.f32 %v71, 0.6931472
    %v73 = vlog2.pop %v70
    %v74 = vmul.f32 %v73, 0.6931472
    %v75 = vadd.f32 %v72, %v74
    %v76 = vrot.slane %v75, 4
    %v77 = vadd.f32 %v75, %v76
    %v78 = vrot.slane %v77, 2
    %v79 = vadd.f32 %v77, %v78
    %v80 = vrot.slane %v79, 1
    %v81 = vadd.f32 %v79, %v80
    %82 = vst [vmem:[#allocation9] sm:$0x1] %v81
    // Predicated region
    $region18: #{tpu_custom_call.1} parent=1 // pred_check
      _
    $region19: #{tpu_custom_call.1} parent=1 // pred_check_branch
      %84 = sbr.rel (0) target = $region21
    $region20: #{tpu_custom_call.1} parent=1 // pred_region
      %s86 = ssub.s32 16, 16
      %87 = vsyncadd [#allocation6], %s86
      %s89 = sshll.u32 [#allocation9], 4
      %s90 = int_to_ptr.vmem [resolvable:$true] %s89
      %92 = dma.vmem_to_hbm [thread:$0]  %s90, 16, %s3, [#allocation6]
    $region21: #{tpu_custom_call.1} parent=1 // pred_fallthru
      _
    // Predicated region
    $region22: #{tpu_custom_call.1} parent=1 // pred_check
      _
    $region23: #{tpu_custom_call.1} parent=1 // pred_check_branch
      %94 = sbr.rel (0) target = $region25
    $region24: #{tpu_custom_call.1} parent=1 // pred_region
      %95 = dma.done [#allocation6], 16
    $region25: #{tpu_custom_call.1} parent=1 // pred_fallthru
      _
    %96 = vsyncpa [#allocation5], 1
    %97 = vsyncpa [#allocation8], 1
    %98 = vsyncpa [#allocation6], 1

</llo_original>
